<compile_context>
chip_gen: v7x
topology: tpu7x:2x2x1
jax: 0.10.0
libtpu: 0.0.40
codegen_flags: <defaults>
</compile_context>

<pallas_src>
import functools

import jax
import jax.numpy as jnp
from jax.experimental import pallas as pl
from jax.experimental.pallas import tpu as pltpu


def _round_up(n, m):
    return ((n + m - 1) // m) * m


def _choose_tile_b(B):
    # Acting / small batches: one tile, minimal padding, grid=1.
    if B <= 256:
        return _round_up(B, 16)
    # Training batches: bigger tiles, but keep grid >= 2 so the "parallel"
    # batch axis can use both TensorCores on v7x.
    if B <= 512:
        return 256
    return 512


def dqn_kernel(num_actions, return_q,
               x_ref, w1_ref, b1_ref, w2_ref, b2_ref, w3_ref, b3_ref,
               *out_refs):
    # Whole network is VMEM-resident for this batch tile: 3 MXU matmuls with
    # f32 accumulation + VPU bias/ReLU; no HBM round-trips for activations.
    x = x_ref[...]
    h1 = jnp.dot(x, w1_ref[...], preferred_element_type=jnp.float32) + b1_ref[...]
    h1 = jnp.maximum(h1, 0.0)
    h2 = jnp.dot(h1.astype(w2_ref.dtype), w2_ref[...],
                 preferred_element_type=jnp.float32) + b2_ref[...]
    h2 = jnp.maximum(h2, 0.0)
    q = jnp.dot(h2.astype(w3_ref.dtype), w3_ref[...],
                preferred_element_type=jnp.float32) + b3_ref[...]

    if return_q:
        q_ref, act_ref = out_refs
        q_ref[...] = q.astype(q_ref.dtype)
    else:
        (act_ref,) = out_refs

    # Fused greedy-action epilogue (acting path). q already has exactly
    # num_actions lanes, so no masking is needed; ties break toward the lowest
    # index (matches torch.max / jnp.argmax).
    lane = jax.lax.broadcasted_iota(jnp.int32, q.shape, 1)
    q_max = jnp.max(q, axis=-1, keepdims=True)
    idx = jnp.where(q == q_max, lane, num_actions)
    act_ref[...] = jnp.min(idx, axis=-1, keepdims=True).astype(jnp.int32)


def prepare_params(params, compute_dtype=jnp.bfloat16):
    """One-time cast of weights/biases; cache the result and reuse per call."""
    w1, b1, w2, b2, w3, b3 = params
    return (w1.astype(compute_dtype), b1.astype(jnp.float32).reshape(1, -1),
            w2.astype(compute_dtype), b2.astype(jnp.float32).reshape(1, -1),
            w3.astype(compute_dtype), b3.astype(jnp.float32).reshape(1, -1))


def dqn_forward(x, prepared_params, *, return_q=True, tile_b=None):
    """x: (B, num_inputs). Returns (q (B,num_actions) f32, act (B,) int32),
    or just act when return_q=False (RL acting path, no q write-back)."""
    w1, b1, w2, b2, w3, b3 = prepared_params
    compute_dtype = w1.dtype
    B, num_inputs = x.shape
    assert num_inputs == w1.shape[0]
    num_actions = w3.shape[1]

    if tile_b is None:
        tile_b = _choose_tile_b(B)
    assert tile_b % 16 == 0  # covers bf16 (16-row) and f32 (8-row) sublane packing
    b_pad = _round_up(B, tile_b)

    # Only x is touched per call: cast, and zero-pad the batch only if needed.
    xc = x.astype(compute_dtype)
    if b_pad != B:
        xp = jnp.zeros((b_pad, num_inputs), compute_dtype).at[:B].set(xc)
    else:
        xp = xc

    def resident(arr):  # full block, constant index -> stays VMEM-resident
        return pl.BlockSpec(arr.shape, lambda i: (0, 0))

    out_shape = [jax.ShapeDtypeStruct((b_pad, 1), jnp.int32)]
    out_specs = [pl.BlockSpec((tile_b, 1), lambda i: (i, 0))]
    if return_q:
        out_shape = [jax.ShapeDtypeStruct((b_pad, num_actions), jnp.float32)] + out_shape
        out_specs = [pl.BlockSpec((tile_b, num_actions), lambda i: (i, 0))] + out_specs

    outs = pl.pallas_call(
        functools.partial(dqn_kernel, num_actions, return_q),
        out_shape=tuple(out_shape),
        grid=(b_pad // tile_b,),
        in_specs=[
            pl.BlockSpec((tile_b, num_inputs), lambda i: (i, 0)),
            resident(w1), resident(b1),
            resident(w2), resident(b2),
            resident(w3), resident(b3),
        ],
        out_specs=tuple(out_specs),
        compiler_params=pltpu.CompilerParams(
            dimension_semantics=("parallel",),  # shards batch tiles across v7x's 2 TCs
        ),
    )(xp, w1, b1, w2, b2, w3, b3)

    if return_q:
        q_pad, act = outs
        q = q_pad if b_pad == B else q_pad[:B]
        return q, act[:B, 0]
    (act,) = outs
    return act[:B, 0]


def init_params(key, num_inputs, num_actions, hidden=128):
    # Deterministic synthetic init (PyTorch-default-like uniform fan-in bound).
    ks = jax.random.split(key, 6)

    def lin(kw, kb, fan_in, fan_out):
        bound = 1.0 / jnp.sqrt(jnp.float32(fan_in))
        w = jax.random.uniform(kw, (fan_in, fan_out), jnp.float32, -bound, bound)
        b = jax.random.uniform(kb, (1, fan_out), jnp.float32, -bound, bound)
        return w, b

    w1, b1 = lin(ks[0], ks[1], num_inputs, hidden)
    w2, b2 = lin(ks[2], ks[3], hidden, hidden)
    w3, b3 = lin(ks[4], ks[5], hidden, num_actions)
    return (w1, b1, w2, b2, w3, b3)


def dqn_reference(x, params):
    w1, b1, w2, b2, w3, b3 = params
    h1 = jnp.maximum(x @ w1 + b1, 0.0)
    h2 = jnp.maximum(h1 @ w2 + b2, 0.0)
    return h2 @ w3 + b3


# TODO(synk): the epsilon-greedy exploration branch of DQN.act() (host-side
# Python RNG + control flow) has no Pallas equivalent; only the greedy
# argmax path is fused into the kernel.

if __name__ == "__main__":
    num_inputs, num_actions = 32, 8
    key = jax.random.PRNGKey(0)
    kx, kp, kx2 = jax.random.split(key, 3)
    params = init_params(kp, num_inputs, num_actions)

    # --- f32 compute path, tiny "acting" batch (grid=1, 16-row tile):
    #     bit-accurate check against the pure-JAX reference. ---
    B = 2
    x = jax.random.normal(kx, (B, num_inputs), jnp.float32)
    q_ref = dqn_reference(x, params)
    p_f32 = prepare_params(params, jnp.float32)
    q, act = dqn_forward(x, p_f32)
    q = jax.block_until_ready(q)
    assert q.shape == (B, num_actions)
    assert act.shape == (B,)
    assert jnp.allclose(q, q_ref, atol=1e-5, rtol=1e-5)
    assert jnp.array_equal(act, jnp.argmax(q, axis=-1).astype(jnp.int32))

    # --- default bf16 compute path (f32 accumulation), multi-tile batch
    #     (B=300 -> tile 256, grid=2, exercises padding + parallel axis). ---
    B2 = 300
    x2 = jax.random.normal(kx2, (B2, num_inputs), jnp.float32)
    p_bf16 = prepare_params(params)  # bfloat16 weights by default
    q2, act2 = dqn_forward(x2, p_bf16)
    q2 = jax.block_until_ready(q2)
    assert q2.shape == (B2, num_actions)
    assert act2.shape == (B2,)
    assert jnp.allclose(q2, dqn_reference(x2, params), atol=1e-1, rtol=1e-1)
    assert jnp.array_equal(act2, jnp.argmax(q2, axis=-1).astype(jnp.int32))

    # --- acting path: greedy actions only, no q HBM write-back. ---
    act_only = jax.block_until_ready(dqn_forward(x2, p_bf16, return_q=False))
    assert act_only.shape == (B2,)
    assert jnp.array_equal(act_only, act2)

    print("KERNEL_OK")
</pallas_src>

<mosaic_0001>
module attributes {stable_mosaic.version = 11 : i64} {
  func.func @dqn_kernel(%arg0: i32, %arg1: memref<16x32xf32, #tpu.memory_space<vmem>>, %arg2: memref<32x128xf32, #tpu.memory_space<vmem>>, %arg3: memref<1x128xf32, #tpu.memory_space<vmem>>, %arg4: memref<128x128xf32, #tpu.memory_space<vmem>>, %arg5: memref<1x128xf32, #tpu.memory_space<vmem>>, %arg6: memref<128x8xf32, #tpu.memory_space<vmem>>, %arg7: memref<1x8xf32, #tpu.memory_space<vmem>>, %arg8: memref<16x8xf32, #tpu.memory_space<vmem>>, %arg9: memref<16x1xi32, #tpu.memory_space<vmem>>) attributes {dimension_semantics = [#tpu.dimension_semantics<parallel>], iteration_bounds = array<i64: 1>, scalar_prefetch = 0 : i64, scratch_operands = 0 : i64, tpu.core_type = #tpu.core_type<tc>, window_params = [{transform_indices = @transform_0, window_bounds = array<i64: 16, 32>}, {pipeline_mode = #tpu.pipeline_mode<synchronous>, transform_indices = @transform_1, window_bounds = array<i64: 32, 128>}, {pipeline_mode = #tpu.pipeline_mode<synchronous>, transform_indices = @transform_2, window_bounds = array<i64: 1, 128>}, {pipeline_mode = #tpu.pipeline_mode<synchronous>, transform_indices = @transform_3, window_bounds = array<i64: 128, 128>}, {pipeline_mode = #tpu.pipeline_mode<synchronous>, transform_indices = @transform_4, window_bounds = array<i64: 1, 128>}, {pipeline_mode = #tpu.pipeline_mode<synchronous>, transform_indices = @transform_5, window_bounds = array<i64: 128, 8>}, {pipeline_mode = #tpu.pipeline_mode<synchronous>, transform_indices = @transform_6, window_bounds = array<i64: 1, 8>}, {transform_indices = @transform_7, window_bounds = array<i64: 16, 8>}, {transform_indices = @transform_8, window_bounds = array<i64: 16, 1>}]} {
    %c0 = arith.constant 0 : index
    %c0_0 = arith.constant 0 : index
    %0 = vector.load %arg1[%c0, %c0_0] : memref<16x32xf32, #tpu.memory_space<vmem>>, vector<16x32xf32>
    %c0_1 = arith.constant 0 : index
    %c0_2 = arith.constant 0 : index
    %1 = vector.load %arg2[%c0_1, %c0_2] : memref<32x128xf32, #tpu.memory_space<vmem>>, vector<32x128xf32>
    %cst = arith.constant dense<0.000000e+00> : vector<16x128xf32>
    %2 = tpu.matmul %0, %1, %cst {dimension_numbers = #tpu.dot_dimension_numbers<[1], [0], [0], [1], [0, 0, 1, 1], [], []>} : vector<16x32xf32>, vector<32x128xf32>, vector<16x128xf32> -> vector<16x128xf32>
    %c0_3 = arith.constant 0 : index
    %c0_4 = arith.constant 0 : index
    %3 = vector.load %arg3[%c0_3, %c0_4] : memref<1x128xf32, #tpu.memory_space<vmem>>, vector<1x128xf32>
    %4 = vector.broadcast %3 : vector<1x128xf32> to vector<16x128xf32>
    %5 = arith.addf %2, %4 : vector<16x128xf32>
    %cst_5 = arith.constant 0.000000e+00 : f32
    %6 = vector.broadcast %cst_5 : f32 to vector<16x128xf32>
    %7 = arith.maximumf %5, %6 : vector<16x128xf32>
    %c0_6 = arith.constant 0 : index
    %c0_7 = arith.constant 0 : index
    %8 = vector.load %arg4[%c0_6, %c0_7] : memref<128x128xf32, #tpu.memory_space<vmem>>, vector<128x128xf32>
    %cst_8 = arith.constant dense<0.000000e+00> : vector<16x128xf32>
    %9 = tpu.matmul %7, %8, %cst_8 {dimension_numbers = #tpu.dot_dimension_numbers<[1], [0], [0], [1], [0, 0, 1, 1], [], []>} : vector<16x128xf32>, vector<128x128xf32>, vector<16x128xf32> -> vector<16x128xf32>
    %c0_9 = arith.constant 0 : index
    %c0_10 = arith.constant 0 : index
    %10 = vector.load %arg5[%c0_9, %c0_10] : memref<1x128xf32, #tpu.memory_space<vmem>>, vector<1x128xf32>
    %11 = vector.broadcast %10 : vector<1x128xf32> to vector<16x128xf32>
    %12 = arith.addf %9, %11 : vector<16x128xf32>
    %cst_11 = arith.constant 0.000000e+00 : f32
    %13 = vector.broadcast %cst_11 : f32 to vector<16x128xf32>
    %14 = arith.maximumf %12, %13 : vector<16x128xf32>
    %c0_12 = arith.constant 0 : index
    %c0_13 = arith.constant 0 : index
    %15 = vector.load %arg6[%c0_12, %c0_13] : memref<128x8xf32, #tpu.memory_space<vmem>>, vector<128x8xf32>
    %cst_14 = arith.constant dense<0.000000e+00> : vector<16x8xf32>
    %16 = tpu.matmul %14, %15, %cst_14 {dimension_numbers = #tpu.dot_dimension_numbers<[1], [0], [0], [1], [0, 0, 1, 1], [], []>} : vector<16x128xf32>, vector<128x8xf32>, vector<16x8xf32> -> vector<16x8xf32>
    %c0_15 = arith.constant 0 : index
    %c0_16 = arith.constant 0 : index
    %17 = vector.load %arg7[%c0_15, %c0_16] : memref<1x8xf32, #tpu.memory_space<vmem>>, vector<1x8xf32>
    %18 = vector.broadcast %17 : vector<1x8xf32> to vector<16x8xf32>
    %19 = arith.addf %16, %18 : vector<16x8xf32>
    %c0_17 = arith.constant 0 : index
    %c0_18 = arith.constant 0 : index
    %20 = vector.load %arg8[%c0_17, %c0_18] : memref<16x8xf32, #tpu.memory_space<vmem>>, vector<16x8xf32>
    tpu.vector_store %arg8[%c0_17, %c0_18], %19 {strides = array<i32>} : memref<16x8xf32, #tpu.memory_space<vmem>>, vector<16x8xf32>,
    %21 = tpu.iota {dimensions = array<i32: 1>} : vector<16x8xi32>
    %cst_19 = arith.constant dense<0xFF800000> : vector<16xf32>
    %22 = vector.multi_reduction <maximumf>, %19, %cst_19 [1] : vector<16x8xf32> to vector<16xf32>
    %23 = vector.shape_cast %22 : vector<16xf32> to vector<16x1xf32>
    %24 = vector.broadcast %23 : vector<16x1xf32> to vector<16x8xf32>
    %25 = arith.cmpf oeq, %19, %24 : vector<16x8xf32>
    %c8_i32 = arith.constant 8 : i32
    %26 = vector.broadcast %c8_i32 : i32 to vector<16x8xi32>
    %27 = arith.select %25, %21, %26 : vector<16x8xi1>, vector<16x8xi32>
    %cst_20 = arith.constant dense<2147483647> : vector<16xi32>
    %28 = vector.multi_reduction <minsi>, %27, %cst_20 [1] : vector<16x8xi32> to vector<16xi32>
    %29 = vector.shape_cast %28 : vector<16xi32> to vector<16x1xi32>
    %c0_21 = arith.constant 0 : index
    %c0_22 = arith.constant 0 : index
    %30 = vector.load %arg9[%c0_21, %c0_22] : memref<16x1xi32, #tpu.memory_space<vmem>>, vector<16x1xi32>
    tpu.vector_store %arg9[%c0_21, %c0_22], %29 {strides = array<i32>} : memref<16x1xi32, #tpu.memory_space<vmem>>, vector<16x1xi32>,
    return
  }
  func.func @transform_0(%arg0: i32) -> (i32, i32) {
    %c0_i32 = arith.constant 0 : i32
    %c0_i32_0 = arith.constant 0 : i32
    return %arg0, %c0_i32 : i32, i32
  }
  func.func @transform_1(%arg0: i32) -> (i32, i32) {
    %c0_i32 = arith.constant 0 : i32
    %c0_i32_0 = arith.constant 0 : i32
    %c0_i32_1 = arith.constant 0 : i32
    return %c0_i32, %c0_i32_0 : i32, i32
  }
  func.func @transform_2(%arg0: i32) -> (i32, i32) {
    %c0_i32 = arith.constant 0 : i32
    %c0_i32_0 = arith.constant 0 : i32
    %c0_i32_1 = arith.constant 0 : i32
    return %c0_i32, %c0_i32_0 : i32, i32
  }
  func.func @transform_3(%arg0: i32) -> (i32, i32) {
    %c0_i32 = arith.constant 0 : i32
    %c0_i32_0 = arith.constant 0 : i32
    %c0_i32_1 = arith.constant 0 : i32
    return %c0_i32, %c0_i32_0 : i32, i32
  }
  func.func @transform_4(%arg0: i32) -> (i32, i32) {
    %c0_i32 = arith.constant 0 : i32
    %c0_i32_0 = arith.constant 0 : i32
    %c0_i32_1 = arith.constant 0 : i32
    return %c0_i32, %c0_i32_0 : i32, i32
  }
  func.func @transform_5(%arg0: i32) -> (i32, i32) {
    %c0_i32 = arith.constant 0 : i32
    %c0_i32_0 = arith.constant 0 : i32
    %c0_i32_1 = arith.constant 0 : i32
    return %c0_i32, %c0_i32_0 : i32, i32
  }
  func.func @transform_6(%arg0: i32) -> (i32, i32) {
    %c0_i32 = arith.constant 0 : i32
    %c0_i32_0 = arith.constant 0 : i32
    %c0_i32_1 = arith.constant 0 : i32
    return %c0_i32, %c0_i32_0 : i32, i32
  }
  func.func @transform_7(%arg0: i32) -> (i32, i32) {
    %c0_i32 = arith.constant 0 : i32
    %c0_i32_0 = arith.constant 0 : i32
    return %arg0, %c0_i32 : i32, i32
  }
  func.func @transform_8(%arg0: i32) -> (i32, i32) {
    %c0_i32 = arith.constant 0 : i32
    %c0_i32_0 = arith.constant 0 : i32
    return %arg0, %c0_i32 : i32, i32
  }
}

</mosaic_0001>

<llo_original>
// kernel: tpu_custom_call.1
$region0: #{tpu_custom_call.1}
  #allocation0 [shape = 'u32[]', space=smem, size = 0x4, offset = 0x4, fixed_abs, tag = 'smem constant byte address 0x4 - core index']
  #allocation1 [shape = 'u32[144,128]{1,0:T(1,128)}', space=vmem, size = 0x12000, scoped, tag = 'internal scratch']
  %s0 = inlined_call_operand.vmem [shape: f32[16,32], index: 0, kind: input, shape index: {}]
  %s1 = inlined_call_operand.hbm [shape: f32[32,128], index: 1, kind: input, shape index: {}]
  %s2 = inlined_call_operand.vmem [shape: f32[1,128], index: 2, kind: input, shape index: {}]
  %s3 = inlined_call_operand.vmem [shape: f32[128,128], index: 3, kind: input, shape index: {}]
  %s4 = inlined_call_operand.vmem [shape: f32[1,128], index: 4, kind: input, shape index: {}]
  %s5 = inlined_call_operand.vmem [shape: f32[128,8], index: 5, kind: input, shape index: {}]
  %s6 = inlined_call_operand.vmem [shape: f32[1,8], index: 6, kind: input, shape index: {}]
  %s7 = inlined_call_operand.vmem [shape: f32[16,8], index: 7, kind: output, shape index: {0}]
  %s8 = inlined_call_operand.vmem [shape: s32[16,1], index: 8, kind: output, shape index: {1}]
  %9 = xla_tuple %s7, %s8
  %s10 = sld [smem:[#allocation0]]
  $region50: #{tpu_custom_call.1} parent=0
    _
  %s12 = ssub.s32 1, %s10
  %s13 = scalar_select 0, %s12, %s10
  $region1: #{tpu_custom_call.1} parent=0
    #allocation2 [shape = 'u8[16384]{0}', space=vmem, size = 0x4000, scoped, tag = 'input window, operand 1, single buffered']
    #allocation3 [shape = 's32[1]{0}', space=sflag, size = 0x4, scoped, tag = 'scoped memory for tpu_custom_call.1']
    %14 = vsyncpa [#allocation3], 0
    // Predicated region
    $region2: #{tpu_custom_call.1} parent=1 // pred_check
      _
    $region3: #{tpu_custom_call.1} parent=1 // pred_check_branch
      %16 = sbr.rel (0) target = $region5
    $region4: #{tpu_custom_call.1} parent=1 // pred_region
      _
    $region5: #{tpu_custom_call.1} parent=1 // pred_fallthru
      _
    // Predicated region
    $region6: #{tpu_custom_call.1} parent=1 // pred_check
      _
    $region7: #{tpu_custom_call.1} parent=1 // pred_check_branch
      %18 = sbr.rel (0) target = $region9
    $region8: #{tpu_custom_call.1} parent=1 // pred_region
      %s20 = ssub.s32 512, 512
      %21 = vsyncadd [#allocation3], %s20
      %s22 = sshll.u32 [#allocation2], 4
      %s23 = int_to_ptr.vmem [resolvable:$true] %s22
      %28 = dma.hbm_to_vmem [thread:$0]  %s1, 512, %s23, [#allocation3], 128, 128, 8
    $region9: #{tpu_custom_call.1} parent=1 // pred_fallthru
      _
    // Predicated region
    $region10: #{tpu_custom_call.1} parent=1 // pred_check
      _
    $region11: #{tpu_custom_call.1} parent=1 // pred_check_branch
      %30 = sbr.rel (0) target = $region13
    $region12: #{tpu_custom_call.1} parent=1 // pred_region
      _
    $region13: #{tpu_custom_call.1} parent=1 // pred_fallthru
      _
    // Predicated region
    $region14: #{tpu_custom_call.1} parent=1 // pred_check
      _
    $region15: #{tpu_custom_call.1} parent=1 // pred_check_branch
      %32 = sbr.rel (0) target = $region17
    $region16: #{tpu_custom_call.1} parent=1 // pred_region
      _
    $region17: #{tpu_custom_call.1} parent=1 // pred_fallthru
      _
    // Predicated region
    $region18: #{tpu_custom_call.1} parent=1 // pred_check
      _
    $region19: #{tpu_custom_call.1} parent=1 // pred_check_branch
      %34 = sbr.rel (0) target = $region21
    $region20: #{tpu_custom_call.1} parent=1 // pred_region
      _
    $region21: #{tpu_custom_call.1} parent=1 // pred_fallthru
      _
    // Predicated region
    $region22: #{tpu_custom_call.1} parent=1 // pred_check
      _
    $region23: #{tpu_custom_call.1} parent=1 // pred_check_branch
      %36 = sbr.rel (0) target = $region25
    $region24: #{tpu_custom_call.1} parent=1 // pred_region
      _
    $region25: #{tpu_custom_call.1} parent=1 // pred_fallthru
      _
    // Predicated region
    $region26: #{tpu_custom_call.1} parent=1 // pred_check
      _
    $region27: #{tpu_custom_call.1} parent=1 // pred_check_branch
      %38 = sbr.rel (0) target = $region29
    $region28: #{tpu_custom_call.1} parent=1 // pred_region
      _
    $region29: #{tpu_custom_call.1} parent=1 // pred_fallthru
      _
    // Predicated region
    $region30: #{tpu_custom_call.1} parent=1 // pred_check
      _
    $region31: #{tpu_custom_call.1} parent=1 // pred_check_branch
      %40 = sbr.rel (0) target = $region33
    $region32: #{tpu_custom_call.1} parent=1 // pred_region
      %41 = dma.done [#allocation3], 512
    $region33: #{tpu_custom_call.1} parent=1 // pred_fallthru
      _
    %v42 = vld [vmem:[%s0] sm:$0xff]
    %v43 = vld [vmem:[%s0 + $0x8] sm:$0xff]
    %v44 = vld [vmem:[#allocation2] sm:$0xff]
    %v45 = vld [vmem:[#allocation2 + $0x8] sm:$0xff]
    %v46 = vld [vmem:[#allocation2 + $0x10] sm:$0xff]
    %v47 = vld [vmem:[#allocation2 + $0x18] sm:$0xff]
    %v48 = vld [vmem:[%s2] sm:$0x1]
    %v50 = vlaneseq
    %v51 = vshrl.u32 %v50, 7
    %v52 = vsub.s32 0, %v51
    %v53 = vrot.slane %v48, %v52
    %vm55 = vcmask 261120
    %v57 = vsel %vm55, %v42, 0
    %v60 = vsel %vm55, %v43, 0
    %62 = vmatprep.subr.mxu0 0.0
    %63 = vmatpush1.msra.mxu0 %v44
    %64 = vmatprep.subr.mxu0 0.0
    %65 = vmatpush1.msra.mxu0 %v45
    %66 = vmatprep.subr.mxu0 0.0
    %67 = vmatpush1.msra.mxu0 %v46
    %68 = vmatprep.subr.mxu0 0.0
    %69 = vmatpush1.msra.mxu0 %v47
    %70 = vmatprep.subr.mxu0 0.0
    %71 = vmatpush1.msra.mxu0 0.0
    %72 = vmatprep.subr.mxu0 0.0
    %73 = vmatpush1.msra.mxu0 0.0
    %74 = vmatprep.subr.mxu0 0.0
    %75 = vmatpush1.msra.mxu0 0.0
    %76 = vmatprep.subr.mxu0 0.0
    %77 = vmatpush1.msra.mxu0 0.0
    %78 = vmatprep.subr.mxu0 0.0
    %79 = vmatpush1.msra.mxu0 0.0
    %80 = vmatprep.subr.mxu0 0.0
    %81 = vmatpush1.msra.mxu0 0.0
    %82 = vmatprep.subr.mxu0 0.0
    %83 = vmatpush1.msra.mxu0 0.0
    %84 = vmatprep.subr.mxu0 0.0
    %85 = vmatpush1.msra.mxu0 0.0
    %86 = vmatprep.subr.mxu0 0.0
    %87 = vmatpush1.msra.mxu0 0.0
    %88 = vmatprep.subr.mxu0 0.0
    %89 = vmatpush1.msra.mxu0 0.0
    %90 = vmatprep.subr.mxu0 0.0
    %91 = vmatpush1.msra.mxu0 0.0
    %92 = vmatprep.subr.mxu0 0.0
    %93 = vmatpush1.msra.mxu0 0.0
    %94 = vmatprep.subr.mxu0 0.0
    %95 = vmatpush1.msra.mxu0 0.0
    %96 = vmatprep.subr.mxu0 0.0
    %97 = vmatpush1.msra.mxu0 0.0
    %98 = vmatprep.subr.mxu0 0.0
    %99 = vmatpush1.msra.mxu0 0.0
    %100 = vmatprep.subr.mxu0 0.0
    %101 = vmatpush1.msra.mxu0 0.0
    %102 = vmatprep.subr.mxu0 0.0
    %103 = vmatpush1.msra.mxu0 0.0
    %104 = vmatprep.subr.mxu0 0.0
    %105 = vmatpush1.msra.mxu0 0.0
    %106 = vmatprep.subr.mxu0 0.0
    %107 = vmatpush1.msra.mxu0 0.0
    %108 = vmatprep.subr.mxu0 0.0
    %109 = vmatpush1.msra.mxu0 0.0
    %110 = vmatprep.subr.mxu0 0.0
    %111 = vmatpush1.msra.mxu0 0.0
    %112 = vmatprep.subr.mxu0 0.0
    %113 = vmatpush1.msra.mxu0 0.0
    %114 = vmatprep.subr.mxu0 0.0
    %115 = vmatpush1.msra.mxu0 0.0
    %116 = vmatprep.subr.mxu0 0.0
    %117 = vmatpush1.msra.mxu0 0.0
    %118 = vmatprep.subr.mxu0 0.0
    %119 = vmatpush1.msra.mxu0 0.0
    %120 = vmatprep.subr.mxu0 0.0
    %121 = vmatpush1.msra.mxu0 0.0
    %122 = vmatprep.subr.mxu0 0.0
    %123 = vmatpush1.msra.mxu0 0.0
    %124 = vmatprep.subr.mxu0 0.0
    %125 = vmatpush1.msra.mxu0 0.0
    %126 = vmatprep.mubr.f32.mxu0 0.0
    %127 = vmatmul.mubr.f32.gmra.mrb[0].mxu0 %v57
    %v128 = vpop.f32.mrb[0].mxu0
    %v129 = vadd.f32 %v53, %v128
    %v130 = vpop.f32.mrb[0].mxu0
    %131 = vmatprep.mubr.f32.mxu0 0.0
    %132 = vmatmul.mubr.f32.gmra.mrb[0].mxu0 %v60
    %v133 = vpop.f32.mrb[0].mxu0
    %v134 = vadd.f32 %v53, %v133
    %v135 = vpop.f32.mrb[0].mxu0
    %136 = vdwg.mxu0
    %v137 = vmax.f32 %v129, 0.0
    %v138 = vmax.f32 %v134, 0.0
    %v139 = vld [vmem:[%s3] sm:$0xff]
    %v140 = vld [vmem:[%s3 + $0x8] sm:$0xff]
    %v141 = vld [vmem:[%s3 + $0x10] sm:$0xff]
    %v142 = vld [vmem:[%s3 + $0x18] sm:$0xff]
    %v143 = vld [vmem:[%s3 + $0x20] sm:$0xff]
    %v144 = vld [vmem:[%s3 + $0x28] sm:$0xff]
    %v145 = vld [vmem:[%s3 + $0x30] sm:$0xff]
    %v146 = vld [vmem:[%s3 + $0x38] sm:$0xff]
    %v147 = vld [vmem:[%s3 + $0x40] sm:$0xff]
    %v148 = vld [vmem:[%s3 + $0x48] sm:$0xff]
    %v149 = vld [vmem:[%s3 + $0x50] sm:$0xff]
    %v150 = vld [vmem:[%s3 + $0x58] sm:$0xff]
    %v151 = vld [vmem:[%s3 + $0x60] sm:$0xff]
    %v152 = vld [vmem:[%s3 + $0x68] sm:$0xff]
    %v153 = vld [vmem:[%s3 + $0x70] sm:$0xff]
    %v154 = vld [vmem:[%s3 + $0x78] sm:$0xff]
    %v155 = vld [vmem:[%s4] sm:$0x1]
    %v157 = vlaneseq
    %v158 = vshrl.u32 %v157, 7
    %v159 = vsub.s32 0, %v158
    %v160 = vrot.slane %v155, %v159
    %162 = vmatprep.subr.mxu0 0.0
    %163 = vmatpush1.msra.mxu0 %v139
    %164 = vmatprep.subr.mxu0 0.0
    %165 = vmatpush1.msra.mxu0 %v140
    %166 = vmatprep.subr.mxu0 0.0
    %167 = vmatpush1.msra.mxu0 %v141
    %168 = vmatprep.subr.mxu0 0.0
    %169 = vmatpush1.msra.mxu0 %v142
    %170 = vmatprep.subr.mxu0 0.0
    %171 = vmatpush1.msra.mxu0 %v143
    %172 = vmatprep.subr.mxu0 0.0
    %173 = vmatpush1.msra.mxu0 %v144
    %174 = vmatprep.subr.mxu0 0.0
    %175 = vmatpush1.msra.mxu0 %v145
    %176 = vmatprep.subr.mxu0 0.0
    %177 = vmatpush1.msra.mxu0 %v146
    %178 = vmatprep.subr.mxu0 0.0
    %179 = vmatpush1.msra.mxu0 %v147
    %180 = vmatprep.subr.mxu0 0.0
    %181 = vmatpush1.msra.mxu0 %v148
    %182 = vmatprep.subr.mxu0 0.0
    %183 = vmatpush1.msra.mxu0 %v149
    %184 = vmatprep.subr.mxu0 0.0
    %185 = vmatpush1.msra.mxu0 %v150
    %186 = vmatprep.subr.mxu0 0.0
    %187 = vmatpush1.msra.mxu0 %v151
    %188 = vmatprep.subr.mxu0 0.0
    %189 = vmatpush1.msra.mxu0 %v152
    %190 = vmatprep.subr.mxu0 0.0
    %191 = vmatpush1.msra.mxu0 %v153
    %192 = vmatprep.subr.mxu0 0.0
    %193 = vmatpush1.msra.mxu0 %v154
    %194 = vmatprep.subr.mxu0 0.0
    %195 = vmatpush1.msra.mxu0 0.0
    %196 = vmatprep.subr.mxu0 0.0
    %197 = vmatpush1.msra.mxu0 0.0
    %198 = vmatprep.subr.mxu0 0.0
    %199 = vmatpush1.msra.mxu0 0.0
    %200 = vmatprep.subr.mxu0 0.0
    %201 = vmatpush1.msra.mxu0 0.0
    %202 = vmatprep.subr.mxu0 0.0
    %203 = vmatpush1.msra.mxu0 0.0
    %204 = vmatprep.subr.mxu0 0.0
    %205 = vmatpush1.msra.mxu0 0.0
    %206 = vmatprep.subr.mxu0 0.0
    %207 = vmatpush1.msra.mxu0 0.0
    %208 = vmatprep.subr.mxu0 0.0
    %209 = vmatpush1.msra.mxu0 0.0
    %210 = vmatprep.subr.mxu0 0.0
    %211 = vmatpush1.msra.mxu0 0.0
    %212 = vmatprep.subr.mxu0 0.0
    %213 = vmatpush1.msra.mxu0 0.0
    %214 = vmatprep.subr.mxu0 0.0
    %215 = vmatpush1.msra.mxu0 0.0
    %216 = vmatprep.subr.mxu0 0.0
    %217 = vmatpush1.msra.mxu0 0.0
    %218 = vmatprep.subr.mxu0 0.0
    %219 = vmatpush1.msra.mxu0 0.0
    %220 = vmatprep.subr.mxu0 0.0
    %221 = vmatpush1.msra.mxu0 0.0
    %222 = vmatprep.subr.mxu0 0.0
    %223 = vmatpush1.msra.mxu0 0.0
    %224 = vmatprep.subr.mxu0 0.0
    %225 = vmatpush1.msra.mxu0 0.0
    %226 = vmatprep.mubr.f32.mxu0 0.0
    %227 = vmatmul.mubr.f32.gmra.mrb[0].mxu0 %v137
    %v228 = vpop.f32.mrb[0].mxu0
    %v229 = vadd.f32 %v160, %v228
    %v230 = vpop.f32.mrb[0].mxu0
    %231 = vmatprep.mubr.f32.mxu0 0.0
    %232 = vmatmul.mubr.f32.gmra.mrb[0].mxu0 %v138
    %v233 = vpop.f32.mrb[0].mxu0
    %v234 = vadd.f32 %v160, %v233
    %v235 = vpop.f32.mrb[0].mxu0
    %236 = vdwg.mxu0
    %v237 = vmax.f32 %v229, 0.0
    %v238 = vmax.f32 %v234, 0.0
    %v239 = vld [vmem:[%s5] sm:$0xff]
    %v240 = vld [vmem:[%s5 + $0x8] sm:$0xff]
    %v241 = vld [vmem:[%s5 + $0x10] sm:$0xff]
    %v242 = vld [vmem:[%s5 + $0x18] sm:$0xff]
    %v243 = vld [vmem:[%s5 + $0x20] sm:$0xff]
    %v244 = vld [vmem:[%s5 + $0x28] sm:$0xff]
    %v245 = vld [vmem:[%s5 + $0x30] sm:$0xff]
    %v246 = vld [vmem:[%s5 + $0x38] sm:$0xff]
    %v247 = vld [vmem:[%s5 + $0x40] sm:$0xff]
    %v248 = vld [vmem:[%s5 + $0x48] sm:$0xff]
    %v249 = vld [vmem:[%s5 + $0x50] sm:$0xff]
    %v250 = vld [vmem:[%s5 + $0x58] sm:$0xff]
    %v251 = vld [vmem:[%s5 + $0x60] sm:$0xff]
    %v252 = vld [vmem:[%s5 + $0x68] sm:$0xff]
    %v253 = vld [vmem:[%s5 + $0x70] sm:$0xff]
    %v254 = vld [vmem:[%s5 + $0x78] sm:$0xff]
    %v255 = vld [vmem:[%s6] sm:$0x1]
    %v257 = vlaneseq
    %v258 = vshrl.u32 %v257, 7
    %v259 = vsub.s32 0, %v258
    %v260 = vrot.slane %v255, %v259
    %262 = vmatprep.subr.mxu0 0.0
    %263 = vmatpush1.msra.mxu0 %v239
    %264 = vmatprep.subr.mxu0 0.0
    %265 = vmatpush1.msra.mxu0 %v240
    %266 = vmatprep.subr.mxu0 0.0
    %267 = vmatpush1.msra.mxu0 %v241
    %268 = vmatprep.subr.mxu0 0.0
    %269 = vmatpush1.msra.mxu0 %v242
    %270 = vmatprep.subr.mxu0 0.0
    %271 = vmatpush1.msra.mxu0 %v243
    %272 = vmatprep.subr.mxu0 0.0
    %273 = vmatpush1.msra.mxu0 %v244
    %274 = vmatprep.subr.mxu0 0.0
    %275 = vmatpush1.msra.mxu0 %v245
    %276 = vmatprep.subr.mxu0 0.0
    %277 = vmatpush1.msra.mxu0 %v246
    %278 = vmatprep.subr.mxu0 0.0
    %279 = vmatpush1.msra.mxu0 %v247
    %280 = vmatprep.subr.mxu0 0.0
    %281 = vmatpush1.msra.mxu0 %v248
    %282 = vmatprep.subr.mxu0 0.0
    %283 = vmatpush1.msra.mxu0 %v249
    %284 = vmatprep.subr.mxu0 0.0
    %285 = vmatpush1.msra.mxu0 %v250
    %286 = vmatprep.subr.mxu0 0.0
    %287 = vmatpush1.msra.mxu0 %v251
    %288 = vmatprep.subr.mxu0 0.0
    %289 = vmatpush1.msra.mxu0 %v252
    %290 = vmatprep.subr.mxu0 0.0
    %291 = vmatpush1.msra.mxu0 %v253
    %292 = vmatprep.subr.mxu0 0.0
    %293 = vmatpush1.msra.mxu0 %v254
    %294 = vmatprep.subr.mxu0 0.0
    %295 = vmatpush1.msra.mxu0 0.0
    %296 = vmatprep.subr.mxu0 0.0
    %297 = vmatpush1.msra.mxu0 0.0
    %298 = vmatprep.subr.mxu0 0.0
    %299 = vmatpush1.msra.mxu0 0.0
    %300 = vmatprep.subr.mxu0 0.0
    %301 = vmatpush1.msra.mxu0 0.0
    %302 = vmatprep.subr.mxu0 0.0
    %303 = vmatpush1.msra.mxu0 0.0
    %304 = vmatprep.subr.mxu0 0.0
    %305 = vmatpush1.msra.mxu0 0.0
    %306 = vmatprep.subr.mxu0 0.0
    %307 = vmatpush1.msra.mxu0 0.0
    %308 = vmatprep.subr.mxu0 0.0
    %309 = vmatpush1.msra.mxu0 0.0
    %310 = vmatprep.subr.mxu0 0.0
    %311 = vmatpush1.msra.mxu0 0.0
    %312 = vmatprep.subr.mxu0 0.0
    %313 = vmatpush1.msra.mxu0 0.0
    %314 = vmatprep.subr.mxu0 0.0
    %315 = vmatpush1.msra.mxu0 0.0
    %316 = vmatprep.subr.mxu0 0.0
    %317 = vmatpush1.msra.mxu0 0.0
    %318 = vmatprep.subr.mxu0 0.0
    %319 = vmatpush1.msra.mxu0 0.0
    %320 = vmatprep.subr.mxu0 0.0
    %321 = vmatpush1.msra.mxu0 0.0
    %322 = vmatprep.subr.mxu0 0.0
    %323 = vmatpush1.msra.mxu0 0.0
    %324 = vmatprep.subr.mxu0 0.0
    %325 = vmatpush1.msra.mxu0 0.0
    %326 = vmatprep.mubr.f32.mxu0 0.0
    %327 = vmatmul.mubr.f32.gmra.mrb[0].mxu0 %v237
    %v328 = vpop.f32.mrb[0].mxu0
    %v329 = vadd.f32 %v260, %v328
    %v330 = vpop.f32.mrb[0].mxu0
    %331 = vmatprep.mubr.f32.mxu0 0.0
    %332 = vmatmul.mubr.f32.gmra.mrb[0].mxu0 %v238
    %v333 = vpop.f32.mrb[0].mxu0
    %v334 = vadd.f32 %v260, %v333
    %v335 = vpop.f32.mrb[0].mxu0
    %336 = vdwg.mxu0
    %vm337 = vcmask 64512
    %338 = vst.msk [vmem:[%s7] sm:$0xff] %vm337, %v329
    %339 = vst.msk [vmem:[%s7 + $0x8] sm:$0xff] %vm337, %v334
    %v340 = vlaneseq
    %v341 = vand.u32 %v340, 127
    %v342 = vsel %vm337, %v329, -inf
    %343 = vmax.xlane.f32.xlu0 %v342
    %v344 = vpop.xlane.xlu0 %343
    %v345 = vsel %vm337, %v334, -inf
    %346 = vmax.xlane.f32.xlu0 %v345
    %v347 = vpop.xlane.xlu0 %346
    %vm348 = vcmp.eq.f32.partialorder %v329, %v344
    %vm349 = vcmp.eq.f32.partialorder %v334, %v347
    %v350 = vsel %vm348, %v341, 8
    %v351 = vsel %vm349, %v341, 8
    %v352 = vsel %vm337, %v350, 2147483647
    %v353 = vand.u32 %v352, 65535
    %v354 = vshra.s32 %v352, 16
    %v355 = vcvt.s32.f32 %v353
    %v356 = vcvt.s32.f32 %v354
    %357 = vmin.xlane.f32.xlu0 %v356
    %v358 = vpop.xlane.xlu0 %357
    %vm359 = vcmp.eq.f32.partialorder %v356, %v358
    %v360 = vsel %vm359, %v355, inf
    %361 = vmin.xlane.f32.xlu0 %v360
    %v362 = vpop.xlane.xlu0 %361
    %v363 = vcvt.f32.s32 %v362
    %v364 = vcvt.f32.s32 %v358
    %v365 = vshll.u32 %v364, 16
    %v366 = vadd.s32 %v365, %v363
    %v367 = vsel %vm337, %v351, 2147483647
    %v368 = vand.u32 %v367, 65535
    %v369 = vshra.s32 %v367, 16
    %v370 = vcvt.s32.f32 %v368
    %v371 = vcvt.s32.f32 %v369
    %372 = vmin.xlane.f32.xlu0 %v371
    %v373 = vpop.xlane.xlu0 %372
    %vm374 = vcmp.eq.f32.partialorder %v371, %v373
    %v375 = vsel %vm374, %v370, inf
    %376 = vmin.xlane.f32.xlu0 %v375
    %v377 = vpop.xlane.xlu0 %376
    %v378 = vcvt.f32.s32 %v377
    %v379 = vcvt.f32.s32 %v373
    %v380 = vshll.u32 %v379, 16
    %v381 = vadd.s32 %v380, %v378
    %vm382 = vcmask 7168
    %383 = vst.msk [vmem:[%s8] sm:$0xff] %vm382, %v366
    %384 = vst.msk [vmem:[%s8 + $0x8] sm:$0xff] %vm382, %v381
    // Predicated region
    $region34: #{tpu_custom_call.1} parent=1 // pred_check
      _
    $region35: #{tpu_custom_call.1} parent=1 // pred_check_branch
      %386 = sbr.rel (0) target = $region37
    $region36: #{tpu_custom_call.1} parent=1 // pred_region
      _
    $region37: #{tpu_custom_call.1} parent=1 // pred_fallthru
      _
    // Predicated region
    $region38: #{tpu_custom_call.1} parent=1 // pred_check
      _
    $region39: #{tpu_custom_call.1} parent=1 // pred_check_branch
      %388 = sbr.rel (0) target = $region41
    $region40: #{tpu_custom_call.1} parent=1 // pred_region
      _
    $region41: #{tpu_custom_call.1} parent=1 // pred_fallthru
      _
    // Predicated region
    $region42: #{tpu_custom_call.1} parent=1 // pred_check
      _
    $region43: #{tpu_custom_call.1} parent=1 // pred_check_branch
      %390 = sbr.rel (0) target = $region45
    $region44: #{tpu_custom_call.1} parent=1 // pred_region
      _
    $region45: #{tpu_custom_call.1} parent=1 // pred_fallthru
      _
    // Predicated region
    $region46: #{tpu_custom_call.1} parent=1 // pred_check
      _
    $region47: #{tpu_custom_call.1} parent=1 // pred_check_branch
      %392 = sbr.rel (0) target = $region49
    $region48: #{tpu_custom_call.1} parent=1 // pred_region
      _
    $region49: #{tpu_custom_call.1} parent=1 // pred_fallthru
      _
    %393 = vsyncpa [#allocation3], 1

</llo_original>
